<compile_context>
chip_gen: v5e
topology: v5e:2x2
jax: 0.10.0
libtpu: 0.0.40
codegen_flags: <defaults>
</compile_context>

<pallas_src>
import functools
import math

import jax
import jax.numpy as jnp
from jax import lax
from jax.experimental import pallas as pl
from jax.experimental.pallas import tpu as pltpu


def _round_up(x, m):
    return ((x + m - 1) // m) * m


def _vmem_limit_bytes():
    """Scoped-VMEM budget: ~3/4 of physical VMEM, capped at 96 MiB.
    v5e/v6e: 128 MiB physical -> 96 MiB; v7x: 64 MiB physical -> 48 MiB."""
    try:
        cap = pltpu.get_tpu_info().vmem_capacity_bytes
    except Exception:  # pragma: no cover - fallback if the query is unavailable
        cap = 64 * 1024 * 1024
    return int(min(cap * 3 // 4, 96 * 1024 * 1024))


# --------------------------------------------------------------------------------------
# Kernel 1: K / V projection, computed ONCE per (batch, kv-tile).
#   K = kv @ Wk + bk,  V = kv @ Wv + bv   (bf16 MXU operands, f32 accumulation, bf16 out)
# --------------------------------------------------------------------------------------
def _kv_proj_kernel(kv_ref, wk_ref, bk_ref, wv_ref, bv_ref, k_ref, v_ref):
    kv = kv_ref[0]                                                       # (tk, Dkv_p) bf16
    k = jnp.dot(kv, wk_ref[...], preferred_element_type=jnp.float32) + bk_ref[...]
    v = jnp.dot(kv, wv_ref[...], preferred_element_type=jnp.float32) + bv_ref[...]
    k_ref[0] = k.astype(k_ref.dtype)
    v_ref[0] = v.astype(v_ref.dtype)


# --------------------------------------------------------------------------------------
# Kernel 2: flash-style cross attention + output projection.
#   grid = (B, Nq tiles, Nkv tiles); Nkv is the innermost "arbitrary" reduction axis with
#   scratch-resident (m, l, acc) state; the (Nq, Nkv) score matrix is never materialized.
# --------------------------------------------------------------------------------------
def _cross_attn_kernel(scale_inv, nkv_real, tk,
                       q_ref, k_ref, v_ref,
                       wq_ref, bq_ref, wo_ref, bo_ref,
                       o_ref,
                       q_scr, m_scr, l_scr, acc_scr):
    ki = pl.program_id(2)

    # ---- Q projection (once per (b, q-tile)) + online-softmax state init ----
    @pl.when(ki == 0)
    def _():
        q = q_ref[0]                                                     # (tq, Dq_p) bf16
        Q = jnp.dot(q, wq_ref[...], preferred_element_type=jnp.float32) + bq_ref[...]
        # Fold 1/sqrt(d) into the small Q tile; keep it bf16 for the score MXU pass.
        q_scr[...] = (Q * scale_inv).astype(q_scr.dtype)
        m_scr[...] = jnp.full(m_scr.shape, -jnp.inf, jnp.float32)
        l_scr[...] = jnp.zeros(l_scr.shape, jnp.float32)
        acc_scr[...] = jnp.zeros(acc_scr.shape, jnp.float32)

    # ---- Scores: contract the feature dim of Q and K directly (no K.T / XLU) ----
    K = k_ref[0]                                                         # (tk, De_p) bf16
    V = v_ref[0]                                                         # (tk, De_p) bf16
    s = lax.dot_general(q_scr[...], K, (((1,), (1,)), ((), ())),
                        preferred_element_type=jnp.float32)              # (tq, tk) f32

    # Mask KV padding (branch only generated when Nkv was padded up to a tile multiple).
    if nkv_real % tk != 0:
        col = ki * tk + lax.broadcasted_iota(jnp.int32, s.shape, 1)
        s = jnp.where(col < nkv_real, s, -jnp.inf)

    # ---- Online (flash-style) softmax update ----
    m_prev = m_scr[...]
    m_new = jnp.maximum(m_prev, jnp.max(s, axis=-1, keepdims=True))
    alpha = jnp.exp(m_prev - m_new)
    p = jnp.exp(s - m_new)
    l_scr[...] = alpha * l_scr[...] + jnp.sum(p, axis=-1, keepdims=True)
    acc_scr[...] = alpha * acc_scr[...] + jnp.dot(
        p.astype(V.dtype), V, preferred_element_type=jnp.float32)
    m_scr[...] = m_new

    # TODO(synk): dropout on attention weights omitted (inference / eval semantics only).

    # ---- Finalize: normalize + output projection (last Nkv tile only) ----
    @pl.when(ki == pl.num_programs(2) - 1)
    def _():
        attended = acc_scr[...] * pl.reciprocal(l_scr[...], approx=True)
        out = jnp.dot(attended.astype(wo_ref.dtype), wo_ref[...],
                      preferred_element_type=jnp.float32) + bo_ref[...]
        o_ref[0] = out.astype(o_ref.dtype)


def cross_modal_attention(query_features, key_value_features, params, embed_dim,
                          *, tile_nq=256, tile_nkv=512):
    """query_features: (B, Nq, Dq=embed_dim); key_value_features: (B, Nkv, Dkv=cross_dim)."""
    B, Nq, Dq = query_features.shape
    _, Nkv, Dkv = key_value_features.shape
    De = embed_dim
    scale_inv = 1.0 / math.sqrt(embed_dim)
    out_dtype = query_features.dtype
    mxu_dtype = jnp.bfloat16

    # ---- Lane (feature) dims -> multiples of 128: lane-dense MXU tiles & HBM stores. ----
    Dq_p, Dkv_p, De_p = _round_up(Dq, 128), _round_up(Dkv, 128), _round_up(De, 128)
    # TODO(synk): for genuinely tiny De (e.g. 32) lane-padding wastes MXU/HBM bytes; the
    # real fix is packing multiple heads / keeping the fused model dim >= 128 upstream.

    # ---- Sequence tiles (8-aligned), sequences padded up to tile multiples. ----
    tq = min(tile_nq, _round_up(Nq, 8))
    # v7x has 2 TensorCores: ensure the two "parallel" grid axes expose >= 2 units of work.
    if B * ((Nq + tq - 1) // tq) < 2 and Nq > 8:
        tq = max(8, _round_up((Nq + 1) // 2, 8))
    tk = min(tile_nkv, _round_up(Nkv, 8))
    Nq_p, Nkv_p = _round_up(Nq, tq), _round_up(Nkv, tk)

    q_in = jnp.pad(query_features,
                   ((0, 0), (0, Nq_p - Nq), (0, Dq_p - Dq))).astype(mxu_dtype)
    kv_in = jnp.pad(key_value_features,
                    ((0, 0), (0, Nkv_p - Nkv), (0, Dkv_p - Dkv))).astype(mxu_dtype)

    def pad_w(w, rows, cols, dtype):
        return jnp.pad(w, ((0, rows - w.shape[0]), (0, cols - w.shape[1]))).astype(dtype)

    wq = pad_w(params["wq"], Dq_p, De_p, mxu_dtype)
    wk = pad_w(params["wk"], Dkv_p, De_p, mxu_dtype)
    wv = pad_w(params["wv"], Dkv_p, De_p, mxu_dtype)
    wo = pad_w(params["wo"], De_p, De_p, mxu_dtype)
    bq = pad_w(params["bq"], 1, De_p, jnp.float32)
    bk = pad_w(params["bk"], 1, De_p, jnp.float32)
    bv = pad_w(params["bv"], 1, De_p, jnp.float32)
    bo = pad_w(params["bo"], 1, De_p, jnp.float32)

    vmem_limit = _vmem_limit_bytes()

    def const_spec(shape):
        # Grid-invariant weight/bias block: fetched once, reused every step; single-buffered
        # because double-buffering a constant block index buys nothing.
        return pl.BlockSpec(shape, lambda *_: (0, 0), pipeline_mode=pl.Buffered(1))

    # ------------------------------------------------------------------
    # Pass 1: project K/V once (NOT once per q-tile).
    # ------------------------------------------------------------------
    proj_cost = pl.CostEstimate(
        flops=int(4 * B * Nkv_p * Dkv_p * De_p),
        transcendentals=0,
        bytes_accessed=int(kv_in.size * 2 + (wk.size + wv.size) * 2
                           + (bk.size + bv.size) * 4 + 2 * B * Nkv_p * De_p * 2),
    )
    k_proj, v_proj = pl.pallas_call(
        _kv_proj_kernel,
        out_shape=(jax.ShapeDtypeStruct((B, Nkv_p, De_p), mxu_dtype),
                   jax.ShapeDtypeStruct((B, Nkv_p, De_p), mxu_dtype)),
        grid_spec=pltpu.PrefetchScalarGridSpec(
            num_scalar_prefetch=0,
            grid=(B, Nkv_p // tk),
            in_specs=[
                pl.BlockSpec((1, tk, Dkv_p), lambda b, ni: (b, ni, 0)),
                const_spec((Dkv_p, De_p)), const_spec((1, De_p)),   # wk, bk
                const_spec((Dkv_p, De_p)), const_spec((1, De_p)),   # wv, bv
            ],
            out_specs=(pl.BlockSpec((1, tk, De_p), lambda b, ni: (b, ni, 0)),
                       pl.BlockSpec((1, tk, De_p), lambda b, ni: (b, ni, 0))),
        ),
        compiler_params=pltpu.CompilerParams(
            dimension_semantics=("parallel", "parallel"),
            vmem_limit_bytes=vmem_limit,
        ),
        cost_estimate=proj_cost,
    )(kv_in, wk, bk, wv, bv)

    # ------------------------------------------------------------------
    # Pass 2: flash-style attention + output projection.
    # ------------------------------------------------------------------
    grid = (B, Nq_p // tq, Nkv_p // tk)
    attn_cost = pl.CostEstimate(
        flops=int(2 * B * (Nq_p * Dq_p * De_p            # Q projection
                           + 2 * Nq_p * Nkv_p * De_p     # scores + p @ V
                           + Nq_p * De_p * De_p)),       # output projection
        transcendentals=int(B * Nq_p * Nkv_p),
        bytes_accessed=int(q_in.size * 2 + 2 * B * Nkv_p * De_p * 2
                           + (wq.size + wo.size) * 2 + (bq.size + bo.size) * 4
                           + B * Nq_p * De_p * jnp.dtype(out_dtype).itemsize),
    )

    grid_spec = pltpu.PrefetchScalarGridSpec(
        num_scalar_prefetch=0,
        grid=grid,
        in_specs=[
            pl.BlockSpec((1, tq, Dq_p), lambda b, qi, ki: (b, qi, 0)),
            # K/V tiles are the only per-ki-step DMA (weights single-buffered); deepen to
            # pl.Buffered(3) here if profiling shows exposed DMA on slow-HBM parts.
            pl.BlockSpec((1, tk, De_p), lambda b, qi, ki: (b, ki, 0)),
            pl.BlockSpec((1, tk, De_p), lambda b, qi, ki: (b, ki, 0)),
            const_spec((Dq_p, De_p)), const_spec((1, De_p)),   # wq, bq
            const_spec((De_p, De_p)), const_spec((1, De_p)),   # wo, bo
        ],
        out_specs=pl.BlockSpec((1, tq, De_p), lambda b, qi, ki: (b, qi, 0)),
        scratch_shapes=[
            pltpu.VMEM((tq, De_p), mxu_dtype),     # scaled, projected Q tile (bf16)
            pltpu.VMEM((tq, 1), jnp.float32),      # running max m
            pltpu.VMEM((tq, 1), jnp.float32),      # running denom l
            pltpu.VMEM((tq, De_p), jnp.float32),   # running numerator acc
        ],
    )

    kernel = functools.partial(_cross_attn_kernel, scale_inv, Nkv, tk)

    out_padded = pl.pallas_call(
        kernel,
        out_shape=jax.ShapeDtypeStruct((B, Nq_p, De_p), out_dtype),
        grid_spec=grid_spec,
        compiler_params=pltpu.CompilerParams(
            dimension_semantics=("parallel", "parallel", "arbitrary"),
            vmem_limit_bytes=vmem_limit,
        ),
        cost_estimate=attn_cost,
    )(q_in, k_proj, v_proj, wq, bq, wo, bo)

    return out_padded[:, :Nq, :De]


def init_params(key, embed_dim, cross_dim, dtype=jnp.float32):
    """Deterministic synthetic parameters matching nn.Linear shapes (stored as (in, out))."""
    ks = jax.random.split(key, 8)

    def lin(kw, kb, fan_in, fan_out):
        bound = 1.0 / math.sqrt(fan_in)
        w = jax.random.uniform(kw, (fan_in, fan_out), dtype, -bound, bound)
        b = jax.random.uniform(kb, (1, fan_out), dtype, -bound, bound)
        return w, b

    wq, bq = lin(ks[0], ks[1], embed_dim, embed_dim)
    wk, bk = lin(ks[2], ks[3], cross_dim, embed_dim)
    wv, bv = lin(ks[4], ks[5], cross_dim, embed_dim)
    wo, bo = lin(ks[6], ks[7], embed_dim, embed_dim)
    return dict(wq=wq, bq=bq, wk=wk, bk=bk, wv=wv, bv=bv, wo=wo, bo=bo)


def _reference(query, kv, params, embed_dim):
    Q = query @ params["wq"] + params["bq"]
    K = kv @ params["wk"] + params["bk"]
    V = kv @ params["wv"] + params["bv"]
    s = jnp.einsum("bqd,bkd->bqk", Q, K) / math.sqrt(embed_dim)
    a = jax.nn.softmax(s, axis=-1)
    att = jnp.einsum("bqk,bkd->bqd", a, V)
    return att @ params["wo"] + params["bo"]


if __name__ == "__main__":
    B, Nq, Nkv = 2, 8, 16
    embed_dim, cross_dim = 32, 16

    key = jax.random.PRNGKey(0)
    k_q, k_kv, k_p = jax.random.split(key, 3)

    query_features = jax.random.normal(k_q, (B, Nq, embed_dim), jnp.float32)
    key_value_features = jax.random.normal(k_kv, (B, Nkv, cross_dim), jnp.float32)
    params = init_params(k_p, embed_dim, cross_dim)

    out = cross_modal_attention(query_features, key_value_features, params, embed_dim)
    out = jax.block_until_ready(out)

    ref = _reference(query_features, key_value_features, params, embed_dim)
    assert out.shape == (B, Nq, embed_dim)
    # bf16 MXU operands (f32 accumulation) + approx EUP reciprocal in the softmax
    # normalization: expect ~1e-3..1e-2 relative error vs the all-f32 reference.
    assert jnp.allclose(out, ref, atol=2e-2, rtol=2e-2), float(jnp.max(jnp.abs(out - ref)))

    print("KERNEL_OK")
</pallas_src>

<mosaic_0001>
module attributes {stable_mosaic.version = 11 : i64} {
  func.func @_kv_proj_kernel(%arg0: i32, %arg1: i32, %arg2: memref<1x16x128xbf16, #tpu.memory_space<vmem>>, %arg3: memref<128x128xbf16, #tpu.memory_space<vmem>>, %arg4: memref<1x128xf32, #tpu.memory_space<vmem>>, %arg5: memref<128x128xbf16, #tpu.memory_space<vmem>>, %arg6: memref<1x128xf32, #tpu.memory_space<vmem>>, %arg7: memref<1x16x128xbf16, #tpu.memory_space<vmem>>, %arg8: memref<1x16x128xbf16, #tpu.memory_space<vmem>>) attributes {dimension_semantics = [#tpu.dimension_semantics<parallel>, #tpu.dimension_semantics<parallel>], iteration_bounds = array<i64: 2, 1>, scalar_prefetch = 0 : i64, scratch_operands = 0 : i64, tpu.core_type = #tpu.core_type<tc>, window_params = [{transform_indices = @transform_0, window_bounds = array<i64: 1, 16, 128>}, {pipeline_mode = #tpu.pipeline_mode<synchronous>, transform_indices = @transform_1, window_bounds = array<i64: 128, 128>}, {pipeline_mode = #tpu.pipeline_mode<synchronous>, transform_indices = @transform_2, window_bounds = array<i64: 1, 128>}, {pipeline_mode = #tpu.pipeline_mode<synchronous>, transform_indices = @transform_3, window_bounds = array<i64: 128, 128>}, {pipeline_mode = #tpu.pipeline_mode<synchronous>, transform_indices = @transform_4, window_bounds = array<i64: 1, 128>}, {transform_indices = @transform_5, window_bounds = array<i64: 1, 16, 128>}, {transform_indices = @transform_6, window_bounds = array<i64: 1, 16, 128>}]} {
    %c0 = arith.constant 0 : index
    %c0_0 = arith.constant 0 : index
    %c0_1 = arith.constant 0 : index
    %0 = vector.load %arg2[%c0, %c0_0, %c0_1] : memref<1x16x128xbf16, #tpu.memory_space<vmem>>, vector<1x16x128xbf16>
    %1 = vector.shape_cast %0 : vector<1x16x128xbf16> to vector<16x128xbf16>
    %c0_2 = arith.constant 0 : index
    %c0_3 = arith.constant 0 : index
    %2 = vector.load %arg3[%c0_2, %c0_3] : memref<128x128xbf16, #tpu.memory_space<vmem>>, vector<128x128xbf16>
    %cst = arith.constant dense<0.000000e+00> : vector<16x128xf32>
    %3 = tpu.matmul %1, %2, %cst {dimension_numbers = #tpu.dot_dimension_numbers<[1], [0], [0], [1], [0, 0, 1, 1], [], []>} : vector<16x128xbf16>, vector<128x128xbf16>, vector<16x128xf32> -> vector<16x128xf32>
    %c0_4 = arith.constant 0 : index
    %c0_5 = arith.constant 0 : index
    %4 = vector.load %arg4[%c0_4, %c0_5] : memref<1x128xf32, #tpu.memory_space<vmem>>, vector<1x128xf32>
    %5 = vector.broadcast %4 : vector<1x128xf32> to vector<16x128xf32>
    %6 = arith.addf %3, %5 : vector<16x128xf32>
    %c0_6 = arith.constant 0 : index
    %c0_7 = arith.constant 0 : index
    %7 = vector.load %arg5[%c0_6, %c0_7] : memref<128x128xbf16, #tpu.memory_space<vmem>>, vector<128x128xbf16>
    %cst_8 = arith.constant dense<0.000000e+00> : vector<16x128xf32>
    %8 = tpu.matmul %1, %7, %cst_8 {dimension_numbers = #tpu.dot_dimension_numbers<[1], [0], [0], [1], [0, 0, 1, 1], [], []>} : vector<16x128xbf16>, vector<128x128xbf16>, vector<16x128xf32> -> vector<16x128xf32>
    %c0_9 = arith.constant 0 : index
    %c0_10 = arith.constant 0 : index
    %9 = vector.load %arg6[%c0_9, %c0_10] : memref<1x128xf32, #tpu.memory_space<vmem>>, vector<1x128xf32>
    %10 = vector.broadcast %9 : vector<1x128xf32> to vector<16x128xf32>
    %11 = arith.addf %8, %10 : vector<16x128xf32>
    %12 = arith.truncf %6 : vector<16x128xf32> to vector<16x128xbf16>
    %c0_11 = arith.constant 0 : index
    %c0_12 = arith.constant 0 : index
    %c0_13 = arith.constant 0 : index
    %13 = vector.load %arg7[%c0_11, %c0_12, %c0_13] : memref<1x16x128xbf16, #tpu.memory_space<vmem>>, vector<1x16x128xbf16>
    %14 = vector.shape_cast %13 : vector<1x16x128xbf16> to vector<16x128xbf16>
    %15 = vector.shape_cast %12 : vector<16x128xbf16> to vector<1x16x128xbf16>
    tpu.vector_store %arg7[%c0_11, %c0_12, %c0_13], %15 {strides = array<i32>} : memref<1x16x128xbf16, #tpu.memory_space<vmem>>, vector<1x16x128xbf16>,
    %16 = arith.truncf %11 : vector<16x128xf32> to vector<16x128xbf16>
    %c0_14 = arith.constant 0 : index
    %c0_15 = arith.constant 0 : index
    %c0_16 = arith.constant 0 : index
    %17 = vector.load %arg8[%c0_14, %c0_15, %c0_16] : memref<1x16x128xbf16, #tpu.memory_space<vmem>>, vector<1x16x128xbf16>
    %18 = vector.shape_cast %17 : vector<1x16x128xbf16> to vector<16x128xbf16>
    %19 = vector.shape_cast %16 : vector<16x128xbf16> to vector<1x16x128xbf16>
    tpu.vector_store %arg8[%c0_14, %c0_15, %c0_16], %19 {strides = array<i32>} : memref<1x16x128xbf16, #tpu.memory_space<vmem>>, vector<1x16x128xbf16>,
    return
  }
  func.func @transform_0(%arg0: i32, %arg1: i32) -> (i32, i32, i32) {
    %c0_i32 = arith.constant 0 : i32
    %c0_i32_0 = arith.constant 0 : i32
    return %arg0, %arg1, %c0_i32 : i32, i32, i32
  }
  func.func @transform_1(%arg0: i32, %arg1: i32) -> (i32, i32) {
    %c0_i32 = arith.constant 0 : i32
    %c0_i32_0 = arith.constant 0 : i32
    %c0_i32_1 = arith.constant 0 : i32
    return %c0_i32, %c0_i32_0 : i32, i32
  }
  func.func @transform_2(%arg0: i32, %arg1: i32) -> (i32, i32) {
    %c0_i32 = arith.constant 0 : i32
    %c0_i32_0 = arith.constant 0 : i32
    %c0_i32_1 = arith.constant 0 : i32
    return %c0_i32, %c0_i32_0 : i32, i32
  }
  func.func @transform_3(%arg0: i32, %arg1: i32) -> (i32, i32) {
    %c0_i32 = arith.constant 0 : i32
    %c0_i32_0 = arith.constant 0 : i32
    %c0_i32_1 = arith.constant 0 : i32
    return %c0_i32, %c0_i32_0 : i32, i32
  }
  func.func @transform_4(%arg0: i32, %arg1: i32) -> (i32, i32) {
    %c0_i32 = arith.constant 0 : i32
    %c0_i32_0 = arith.constant 0 : i32
    %c0_i32_1 = arith.constant 0 : i32
    return %c0_i32, %c0_i32_0 : i32, i32
  }
  func.func @transform_5(%arg0: i32, %arg1: i32) -> (i32, i32, i32) {
    %c0_i32 = arith.constant 0 : i32
    %c0_i32_0 = arith.constant 0 : i32
    return %arg0, %arg1, %c0_i32 : i32, i32, i32
  }
  func.func @transform_6(%arg0: i32, %arg1: i32) -> (i32, i32, i32) {
    %c0_i32 = arith.constant 0 : i32
    %c0_i32_0 = arith.constant 0 : i32
    return %arg0, %arg1, %c0_i32 : i32, i32, i32
  }
}

</mosaic_0001>

<llo_original>
// kernel: tpu_custom_call.1
$region0: #{tpu_custom_call.1}
  #allocation0 [shape = 'u32[]', space=smem, size = 0x4, offset = 0x4, fixed_abs, tag = 'smem constant byte address 0x4 - core index']
  #allocation1 [shape = 'u32[72,128]{1,0:T(1,128)}', space=vmem, size = 0x9000, scoped, tag = 'internal scratch']
  %s0 = inlined_call_operand.hbm [shape: bf16[2,16,128], index: 0, kind: input, shape index: {}]
  %s1 = inlined_call_operand.hbm [shape: bf16[128,128], index: 1, kind: input, shape index: {}]
  %s2 = inlined_call_operand.vmem [shape: f32[1,128], index: 2, kind: input, shape index: {}]
  %s3 = inlined_call_operand.hbm [shape: bf16[128,128], index: 3, kind: input, shape index: {}]
  %s4 = inlined_call_operand.vmem [shape: f32[1,128], index: 4, kind: input, shape index: {}]
  %s5 = inlined_call_operand.hbm [shape: bf16[2,16,128], index: 5, kind: output, shape index: {0}]
  %s6 = inlined_call_operand.hbm [shape: bf16[2,16,128], index: 6, kind: output, shape index: {1}]
  %7 = xla_tuple %s5, %s6
  %s8 = sld [smem:[#allocation0]]
  $region73: #{tpu_custom_call.1} parent=0
    _
  %s10 = ssub.s32 1, %s8
  %s11 = scalar_select 0, %s10, %s8
  $region1: #{tpu_custom_call.1} parent=0
    #allocation2 [shape = 'u8[8192]{0}', space=vmem, size = 0x2000, scoped, tag = 'input window, operand 0']
    #allocation3 [shape = 's32[2]{0}', space=sflag, size = 0x8, scoped, tag = 'scoped memory for tpu_custom_call.1']
    #allocation4 [shape = 's32[2]{0}', space=sflag, size = 0x8, scoped, tag = 'scoped memory for tpu_custom_call.1']
    #allocation5 [shape = 'u8[32768]{0}', space=vmem, size = 0x8000, scoped, tag = 'input window, operand 1, single buffered']
    #allocation6 [shape = 's32[1]{0}', space=sflag, size = 0x4, scoped, tag = 'scoped memory for tpu_custom_call.1']
    #allocation7 [shape = 'u8[32768]{0}', space=vmem, size = 0x8000, scoped, tag = 'input window, operand 3, single buffered']
    #allocation8 [shape = 'u8[8192]{0}', space=vmem, size = 0x2000, scoped, tag = 'output window, operand 0']
    #allocation9 [shape = 'u8[8192]{0}', space=vmem, size = 0x2000, scoped, tag = 'output window, operand 1']
    #allocation10 [shape = 's32[2]{0}', space=sflag, size = 0x8, scoped, tag = 'scoped memory for tpu_custom_call.1']
    %12 = vsyncpa [#allocation3], 0
    %s13 = scalar_lea.sflag [#allocation3], 1
    %14 = vsyncpa %s13, 0
    %15 = vsyncpa [#allocation6], 0
    %16 = vsyncpa [#allocation4], 0
    %s17 = scalar_lea.sflag [#allocation4], 1
    %18 = vsyncpa %s17, 0
    %19 = vsyncpa [#allocation10], 0
    %s20 = scalar_lea.sflag [#allocation10], 1
    %21 = vsyncpa %s20, 0
    loop: start=0, step=1, limit=4
    $region2: #{tpu_custom_call.1} parent=1 // loop_pre_header
      _
    $region3: #{tpu_custom_call.1} parent=1 // loop_header
      %s23 = sphi 0, %s27
      %p24 = scmp.ge.s32.totalorder %s23, 4
      %s30 = sphi 0, %s42
      %s31 = sphi 0, %s38
      %s32 = sphi 0, %s30
      %s33 = sphi 0, %s31
      %s34 = sphi 0, %s32
      %s35 = sphi 0, %s33
      %s47 = sphi 0, %s49
      %s50 = sphi 0, %s47
      %s51 = sphi 0, %s50
      %s67 = sphi 0, %s51
      %s71 = sphi 0, %s71
      %s73 = sphi 0, %s71
      %s74 = sphi 0, %s73
      %s88 = sphi 0, %s74
      %s92 = sphi 0, %s92
      %s94 = sphi 0, %s92
      %s95 = sphi 0, %s94
      %s109 = sphi 0, %s95
      %s113 = sphi 0, %s113
      %s115 = sphi 0, %s113
      %s116 = sphi 0, %s115
      %s130 = sphi 0, %s116
      %s134 = sphi 0, %s134
      %s136 = sphi 0, %s134
      %s137 = sphi 0, %s136
      %s151 = sphi 0, %s137
      %s159 = sphi 0, %s161
      %s162 = sphi 0, %s159
      %s163 = sphi 0, %s162
      %s179 = sphi 0, %s163
      %s187 = sphi 0, %s189
      %s190 = sphi 0, %s187
      %s191 = sphi 0, %s190
      %s207 = sphi 0, %s191
    $region4: #{tpu_custom_call.1} parent=1 // loop_header_branch
      %26 = sbr.rel (%p24) target = $region8
    $region5: #{tpu_custom_call.1} parent=1 // loop_body
      %s28 = ssub.s32 %s23, 1
      %s29 = ssub.s32 %s23, 2
      %s36 = sadd.s32 1, %s31
      %p37 = scmp.ge.s32.totalorder %s36, 1
      %s38 = scalar_select %p37, 0, %s36
      %s39 = sadd.s32 1, %s30
      %s40 = scalar_select %p37, %s39, %s30
      %p41 = scmp.ge.s32.totalorder %s40, 2
      %s42 = scalar_select %p41, 0, %s40
      %s43 = ssub.s32 %s30, %s42
      %s44 = ssub.s32 %s31, %s38
      %s45 = sor.u32 %s43, %s44
      %p46 = scmp.eq.s32.totalorder %s45, 0
      %s48 = sadd.s32 %s47, 1
      %s49 = scalar_select %p46, %s47, %s48
      %p52 = pneg %p46
      %p53 = scmp.eq.s32.totalorder %s23, 1
      %p54 = por %p52, %p53
      %p55 = scmp.ne.s32.totalorder %s47, %s50
      %p56 = scmp.eq.s32.totalorder %s23, 0
      %p57 = por %p55, %p56
      %p58 = scmp.ne.s32.totalorder %s47, %s50
      %p59 = scmp.eq.s32.totalorder %s28, 1
      %p60 = por %p58, %p59
      %p61 = scmp.ne.s32.totalorder %s50, %s51
      %p62 = scmp.eq.s32.totalorder %s28, 0
      %p63 = por %p61, %p62
      %p64 = scmp.ne.s32.totalorder %s50, %s51
      %p65 = scmp.eq.s32.totalorder %s29, 1
      %p66 = por %p64, %p65
      %p68 = scmp.ne.s32.totalorder %s51, %s67
      %p69 = scmp.eq.s32.totalorder %s29, 0
      %p70 = por %p68, %p69
      %s72 = sadd.s32 %s71, 1
      %p75 = scmp.eq.s32.totalorder %s23, 1
      %p76 = scmp.ne.s32.totalorder %s71, %s73
      %p77 = scmp.eq.s32.totalorder %s23, 0
      %p78 = por %p76, %p77
      %p79 = scmp.ne.s32.totalorder %s71, %s73
      %p80 = scmp.eq.s32.totalorder %s28, 1
      %p81 = por %p79, %p80
      %p82 = scmp.ne.s32.totalorder %s73, %s74
      %p83 = scmp.eq.s32.totalorder %s28, 0
      %p84 = por %p82, %p83
      %p85 = scmp.ne.s32.totalorder %s73, %s74
      %p86 = scmp.eq.s32.totalorder %s29, 1
      %p87 = por %p85, %p86
      %p89 = scmp.ne.s32.totalorder %s74, %s88
      %p90 = scmp.eq.s32.totalorder %s29, 0
      %p91 = por %p89, %p90
      %s93 = sadd.s32 %s92, 1
      %p96 = scmp.eq.s32.totalorder %s23, 1
      %p97 = scmp.ne.s32.totalorder %s92, %s94
      %p98 = scmp.eq.s32.totalorder %s23, 0
      %p99 = por %p97, %p98
      %p100 = scmp.ne.s32.totalorder %s92, %s94
      %p101 = scmp.eq.s32.totalorder %s28, 1
      %p102 = por %p100, %p101
      %p103 = scmp.ne.s32.totalorder %s94, %s95
      %p104 = scmp.eq.s32.totalorder %s28, 0
      %p105 = por %p103, %p104
      %p106 = scmp.ne.s32.totalorder %s94, %s95
      %p107 = scmp.eq.s32.totalorder %s29, 1
      %p108 = por %p106, %p107
      %p110 = scmp.ne.s32.totalorder %s95, %s109
      %p111 = scmp.eq.s32.totalorder %s29, 0
      %p112 = por %p110, %p111
      %s114 = sadd.s32 %s113, 1
      %p117 = scmp.eq.s32.totalorder %s23, 1
      %p118 = scmp.ne.s32.totalorder %s113, %s115
      %p119 = scmp.eq.s32.totalorder %s23, 0
      %p120 = por %p118, %p119
      %p121 = scmp.ne.s32.totalorder %s113, %s115
      %p122 = scmp.eq.s32.totalorder %s28, 1
      %p123 = por %p121, %p122
      %p124 = scmp.ne.s32.totalorder %s115, %s116
      %p125 = scmp.eq.s32.totalorder %s28, 0
      %p126 = por %p124, %p125
      %p127 = scmp.ne.s32.totalorder %s115, %s116
      %p128 = scmp.eq.s32.totalorder %s29, 1
      %p129 = por %p127, %p128
      %p131 = scmp.ne.s32.totalorder %s116, %s130
      %p132 = scmp.eq.s32.totalorder %s29, 0
      %p133 = por %p131, %p132
      %s135 = sadd.s32 %s134, 1
      %p138 = scmp.eq.s32.totalorder %s23, 1
      %p139 = scmp.ne.s32.totalorder %s134, %s136
      %p140 = scmp.eq.s32.totalorder %s23, 0
      %p141 = por %p139, %p140
      %p142 = scmp.ne.s32.totalorder %s134, %s136
      %p143 = scmp.eq.s32.totalorder %s28, 1
      %p144 = por %p142, %p143
      %p145 = scmp.ne.s32.totalorder %s136, %s137
      %p146 = scmp.eq.s32.totalorder %s28, 0
      %p147 = por %p145, %p146
      %p148 = scmp.ne.s32.totalorder %s136, %s137
      %p149 = scmp.eq.s32.totalorder %s29, 1
      %p150 = por %p148, %p149
      %p152 = scmp.ne.s32.totalorder %s137, %s151
      %p153 = scmp.eq.s32.totalorder %s29, 0
      %p154 = por %p152, %p153
      %s155 = ssub.s32 %s30, %s42
      %s156 = ssub.s32 %s31, %s38
      %s157 = sor.u32 %s155, %s156
      %p158 = scmp.eq.s32.totalorder %s157, 0
      %s160 = sadd.s32 %s159, 1
      %s161 = scalar_select %p158, %s159, %s160
      %p164 = pneg %p158
      %p165 = scmp.eq.s32.totalorder %s23, 1
      %p166 = por %p164, %p165
      %p167 = scmp.ne.s32.totalorder %s159, %s162
      %p168 = scmp.eq.s32.totalorder %s23, 0
      %p169 = por %p167, %p168
      %p170 = scmp.ne.s32.totalorder %s159, %s162
      %p171 = scmp.eq.s32.totalorder %s28, 1
      %p172 = por %p170, %p171
      %p173 = scmp.ne.s32.totalorder %s162, %s163
      %p174 = scmp.eq.s32.totalorder %s28, 0
      %p175 = por %p173, %p174
      %p176 = scmp.ne.s32.totalorder %s162, %s163
      %p177 = scmp.eq.s32.totalorder %s29, 1
      %p178 = por %p176, %p177
      %p180 = scmp.ne.s32.totalorder %s163, %s179
      %p181 = scmp.eq.s32.totalorder %s29, 0
      %p182 = por %p180, %p181
      %s183 = ssub.s32 %s30, %s42
      %s184 = ssub.s32 %s31, %s38
      %s185 = sor.u32 %s183, %s184
      %p186 = scmp.eq.s32.totalorder %s185, 0
      %s188 = sadd.s32 %s187, 1
      %s189 = scalar_select %p186, %s187, %s188
      %p192 = pneg %p186
      %p193 = scmp.eq.s32.totalorder %s23, 1
      %p194 = por %p192, %p193
      %p195 = scmp.ne.s32.totalorder %s187, %s190
      %p196 = scmp.eq.s32.totalorder %s23, 0
      %p197 = por %p195, %p196
      %p198 = scmp.ne.s32.totalorder %s187, %s190
      %p199 = scmp.eq.s32.totalorder %s28, 1
      %p200 = por %p198, %p199
      %p201 = scmp.ne.s32.totalorder %s190, %s191
      %p202 = scmp.eq.s32.totalorder %s28, 0
      %p203 = por %p201, %p202
      %p204 = scmp.ne.s32.totalorder %s190, %s191
      %p205 = scmp.eq.s32.totalorder %s29, 1
      %p206 = por %p204, %p205
      %p208 = scmp.ne.s32.totalorder %s191, %s207
      %p209 = scmp.eq.s32.totalorder %s29, 0
      %p210 = por %p208, %p209
      %p211 = scmp.le.s32.totalorder 1, %s23
      %p212 = scmp.lt.s32.totalorder %s23, 3
      %p213 = pnand %p211, %p212
      %p214 = pneg %p213
      // Predicated region
      $region9: #{tpu_custom_call.1} parent=5 // pred_check
        _
      $region10: #{tpu_custom_call.1} parent=5 // pred_check_branch
        %216 = sbr.rel (%p213) target = $region12
      $region11: #{tpu_custom_call.1} parent=5 // pred_region
        %s217 = ssub.s32 %s23, 1
        // Predicated region
        $region13: #{tpu_custom_call.1} parent=11 // pred_check
          %p218 = pneg %p84
        $region14: #{tpu_custom_call.1} parent=11 // pred_check_branch
          %220 = sbr.rel (%p218) target = $region16
        $region15: #{tpu_custom_call.1} parent=11 // pred_region
          %222 = vsyncadd [#allocation6], 0
          %s223 = sshll.u32 %s1, 4
          %s224 = int_to_ptr.hbm [resolvable:$true] %s223
          %s225 = sshll.u32 [#allocation5], 4
          %s226 = int_to_ptr.vmem [resolvable:$true] %s225
          %231 = dma.hbm_to_vmem [thread:$0]  %s224, 1024, %s226, [#allocation6], 64, 64, 4
        $region16: #{tpu_custom_call.1} parent=11 // pred_fallthru
          _
        // Predicated region
        $region17: #{tpu_custom_call.1} parent=11 // pred_check
          %p232 = pneg %p105
        $region18: #{tpu_custom_call.1} parent=11 // pred_check_branch
          %234 = sbr.rel (%p232) target = $region20
        $region19: #{tpu_custom_call.1} parent=11 // pred_region
          _
        $region20: #{tpu_custom_call.1} parent=11 // pred_fallthru
          _
        // Predicated region
        $region21: #{tpu_custom_call.1} parent=11 // pred_check
          %p235 = pneg %p126
        $region22: #{tpu_custom_call.1} parent=11 // pred_check_branch
          %237 = sbr.rel (%p235) target = $region24
        $region23: #{tpu_custom_call.1} parent=11 // pred_region
          %239 = vsyncadd [#allocation6], 0
          %s240 = sshll.u32 %s3, 4
          %s241 = int_to_ptr.hbm [resolvable:$true] %s240
          %s242 = sshll.u32 [#allocation7], 4
          %s243 = int_to_ptr.vmem [resolvable:$true] %s242
          %248 = dma.hbm_to_vmem [thread:$0]  %s241, 1024, %s243, [#allocation6], 64, 64, 4
        $region24: #{tpu_custom_call.1} parent=11 // pred_fallthru
          _
        // Predicated region
        $region25: #{tpu_custom_call.1} parent=11 // pred_check
          %p249 = pneg %p147
        $region26: #{tpu_custom_call.1} parent=11 // pred_check_branch
          %251 = sbr.rel (%p249) target = $region28
        $region27: #{tpu_custom_call.1} parent=11 // pred_region
          _
        $region28: #{tpu_custom_call.1} parent=11 // pred_fallthru
          _
      $region12: #{tpu_custom_call.1} parent=5 // pred_fallthru
        _
      %p252 = scmp.lt.s32.totalorder %s23, 2
      // Predicated region
      $region29: #{tpu_custom_call.1} parent=5 // pred_check
        %p253 = pneg %p252
      $region30: #{tpu_custom_call.1} parent=5 // pred_check_branch
        %255 = sbr.rel (%p253) target = $region32
      $region31: #{tpu_custom_call.1} parent=5 // pred_region
        // Predicated region
        $region33: #{tpu_custom_call.1} parent=31 // pred_check
          %p256 = pneg %p57
        $region34: #{tpu_custom_call.1} parent=31 // pred_check_branch
          %258 = sbr.rel (%p256) target = $region36
        $region35: #{tpu_custom_call.1} parent=31 // pred_region
          %s259 = sand.u32 %s47, 1
          %s260 = scalar_lea.sflag [#allocation3], %s259
          %s261 = sand.u32 %s47, 1
          %s262 = smul.addr %s261, 8
          %s263 = scalar_lea.vmem [#allocation2], %s262
          %s264 = smul.u32 2, %s31
          %266 = vsyncadd %s260, 0
          %s267 = smul.addr %s30, 2
          %s268 = sadd.s32 %s264, %s267
          %s269 = smul.addr %s268, 4
          %s270 = scalar_lea.hbm %s0, %s269
          %s271 = sshll.u32 %s270, 4
          %s272 = int_to_ptr.hbm [resolvable:$true] %s271
          %s273 = sshll.u32 %s263, 4
          %s274 = int_to_ptr.vmem [resolvable:$true] %s273
          %279 = dma.hbm_to_vmem [thread:$0]  %s272, 128, %s274, %s260, 64, 64, 4
        $region36: #{tpu_custom_call.1} parent=31 // pred_fallthru
          _
      $region32: #{tpu_custom_call.1} parent=5 // pred_fallthru
        _
      %p280 = scmp.le.s32.totalorder 1, %s23
      %p281 = scmp.lt.s32.totalorder %s23, 3
      %p282 = pnand %p280, %p281
      %p283 = pneg %p282
      // Predicated region
      $region37: #{tpu_custom_call.1} parent=5 // pred_check
        _
      $region38: #{tpu_custom_call.1} parent=5 // pred_check_branch
        %285 = sbr.rel (%p282) target = $region40
      $region39: #{tpu_custom_call.1} parent=5 // pred_region
        %s286 = ssub.s32 %s23, 1
        %s287 = sand.u32 %s50, 1
        %s288 = scalar_lea.sflag [#allocation3], %s287
        %s289 = sand.u32 %s50, 1
        %s290 = smul.addr %s289, 8
        %s291 = scalar_lea.vmem [#allocation2], %s290
        // Predicated region
        $region41: #{tpu_custom_call.1} parent=39 // pred_check
          %p292 = pneg %p63
        $region42: #{tpu_custom_call.1} parent=39 // pred_check_branch
          %294 = sbr.rel (%p292) target = $region44
        $region43: #{tpu_custom_call.1} parent=39 // pred_region
          %296 = dma.done %s288, 128
        $region44: #{tpu_custom_call.1} parent=39 // pred_fallthru
          _
        // Predicated region
        $region45: #{tpu_custom_call.1} parent=39 // pred_check
          %p297 = pneg %p84
        $region46: #{tpu_custom_call.1} parent=39 // pred_check_branch
          %299 = sbr.rel (%p297) target = $region48
        $region47: #{tpu_custom_call.1} parent=39 // pred_region
          %301 = dma.done [#allocation6], 1024
        $region48: #{tpu_custom_call.1} parent=39 // pred_fallthru
          _
        // Predicated region
        $region49: #{tpu_custom_call.1} parent=39 // pred_check
          %p302 = pneg %p126
        $region50: #{tpu_custom_call.1} parent=39 // pred_check_branch
          %304 = sbr.rel (%p302) target = $region52
        $region51: #{tpu_custom_call.1} parent=39 // pred_region
          %306 = dma.done [#allocation6], 1024
        $region52: #{tpu_custom_call.1} parent=39 // pred_fallthru
          _
        %s307 = sand.u32 %s50, 1
        %s308 = scalar_lea.sflag [#allocation3], %s307
        %s309 = sand.u32 %s50, 1
        %s310 = smul.addr %s309, 8
        %s311 = scalar_lea.vmem [#allocation2], %s310
        %p312 = pneg %p63
        %p313 = pneg %p60
        %p314 = pneg %p84
        %p315 = pneg %p81
        %p316 = pneg %p105
        %p317 = pneg %p102
        %p318 = pneg %p126
        %p319 = pneg %p123
        %p320 = pneg %p147
        %p321 = pneg %p144
        %p322 = pneg %p175
        %p323 = pneg %p172
        %s324 = sand.u32 %s162, 1
        %s325 = scalar_lea.sflag [#allocation4], %s324
        %s326 = sand.u32 %s162, 1
        %s327 = smul.addr %s326, 8
        %s328 = scalar_lea.vmem [#allocation8], %s327
        %p329 = pneg %p203
        %p330 = pneg %p200
        %s331 = sand.u32 %s190, 1
        %s332 = scalar_lea.sflag [#allocation10], %s331
        %s333 = sand.u32 %s190, 1
        %s334 = smul.addr %s333, 8
        %s335 = scalar_lea.vmem [#allocation9], %s334
        %s336 = smul.u32 2, %s33
        %s337 = smul.u32 2, %s33
        %s338 = smul.u32 2, %s33
        %v339 = vld [vmem:[%s291] sm:$0xf]
        %v340 = vld [vmem:[%s291 + $0x4] sm:$0xf]
        %v341 = vld [vmem:[#allocation5] sm:$0xf]
        %v342 = vld [vmem:[#allocation5 + $0x4] sm:$0xf]
        %v343 = vld [vmem:[#allocation5 + $0x8] sm:$0xf]
        %v344 = vld [vmem:[#allocation5 + $0xc] sm:$0xf]
        %v345 = vld [vmem:[#allocation5 + $0x10] sm:$0xf]
        %v346 = vld [vmem:[#allocation5 + $0x14] sm:$0xf]
        %v347 = vld [vmem:[#allocation5 + $0x18] sm:$0xf]
        %v348 = vld [vmem:[#allocation5 + $0x1c] sm:$0xf]
        %v349 = vld [vmem:[#allocation5 + $0x20] sm:$0xf]
        %v350 = vld [vmem:[#allocation5 + $0x24] sm:$0xf]
        %v351 = vld [vmem:[#allocation5 + $0x28] sm:$0xf]
        %v352 = vld [vmem:[#allocation5 + $0x2c] sm:$0xf]
        %v353 = vld [vmem:[#allocation5 + $0x30] sm:$0xf]
        %v354 = vld [vmem:[#allocation5 + $0x34] sm:$0xf]
        %v355 = vld [vmem:[#allocation5 + $0x38] sm:$0xf]
        %v356 = vld [vmem:[#allocation5 + $0x3c] sm:$0xf]
        %v357 = vld [vmem:[%s2] sm:$0x1]
        %v359 = vperm.slane %v357, 0
        %v363 = vunpack.c.l.b16 %v339
        %v364 = vunpack.c.l.b16 %v340
        %v365 = vpack.c.b16 %v364, %v363
        %v383 = vunpack.c.l.b16 %v341
        %v384 = vunpack.c.l.b16 %v342
        %v385 = vunpack.c.l.b16 %v343
        %v386 = vunpack.c.l.b16 %v344
        %v387 = vunpack.c.l.b16 %v345
        %v388 = vunpack.c.l.b16 %v346
        %v389 = vunpack.c.l.b16 %v347
        %v390 = vunpack.c.l.b16 %v348
        %v391 = vunpack.c.l.b16 %v349
        %v392 = vunpack.c.l.b16 %v350
        %v393 = vunpack.c.l.b16 %v351
        %v394 = vunpack.c.l.b16 %v352
        %v395 = vunpack.c.l.b16 %v353
        %v396 = vunpack.c.l.b16 %v354
        %v397 = vunpack.c.l.b16 %v355
        %v398 = vunpack.c.l.b16 %v356
        %v399 = vpack.c.b16 %v384, %v383
        %v400 = vpack.c.b16 %v386, %v385
        %v401 = vpack.c.b16 %v388, %v387
        %v402 = vpack.c.b16 %v390, %v389
        %v403 = vpack.c.b16 %v392, %v391
        %v404 = vpack.c.b16 %v394, %v393
        %v405 = vpack.c.b16 %v396, %v395
        %v406 = vpack.c.b16 %v398, %v397
        %415 = vmatpush.bf16.msra.mxu0 %v406
        %416 = vmatpush.bf16.msra.mxu0 %v405
        %417 = vmatpush.bf16.msra.mxu0 %v404
        %418 = vmatpush.bf16.msra.mxu0 %v403
        %419 = vmatpush.bf16.msra.mxu0 %v402
        %420 = vmatpush.bf16.msra.mxu0 %v401
        %421 = vmatpush.bf16.msra.mxu0 %v400
        %422 = vmatpush.bf16.msra.mxu0 %v399
        %423 = vmatmul.bf16.gmra.mxu0 %v365
        %v424 = vpop.f32.mrf.mxu0
        %v425 = vadd.f32 %v359, %v424
        %v426 = vpop.f32.mrf.mxu0
        %v427 = vadd.f32 %v359, %v426
        %428 = vdwg.mxu0
        %v429 = vld [vmem:[#allocation7] sm:$0xf]
        %v430 = vld [vmem:[#allocation7 + $0x4] sm:$0xf]
        %v431 = vld [vmem:[#allocation7 + $0x8] sm:$0xf]
        %v432 = vld [vmem:[#allocation7 + $0xc] sm:$0xf]
        %v433 = vld [vmem:[#allocation7 + $0x10] sm:$0xf]
        %v434 = vld [vmem:[#allocation7 + $0x14] sm:$0xf]
        %v435 = vld [vmem:[#allocation7 + $0x18] sm:$0xf]
        %v436 = vld [vmem:[#allocation7 + $0x1c] sm:$0xf]
        %v437 = vld [vmem:[#allocation7 + $0x20] sm:$0xf]
        %v438 = vld [vmem:[#allocation7 + $0x24] sm:$0xf]
        %v439 = vld [vmem:[#allocation7 + $0x28] sm:$0xf]
        %v440 = vld [vmem:[#allocation7 + $0x2c] sm:$0xf]
        %v441 = vld [vmem:[#allocation7 + $0x30] sm:$0xf]
        %v442 = vld [vmem:[#allocation7 + $0x34] sm:$0xf]
        %v443 = vld [vmem:[#allocation7 + $0x38] sm:$0xf]
        %v444 = vld [vmem:[#allocation7 + $0x3c] sm:$0xf]
        %v445 = vld [vmem:[%s4] sm:$0x1]
        %v447 = vperm.slane %v445, 0
        %v465 = vunpack.c.l.b16 %v429
        %v466 = vunpack.c.l.b16 %v430
        %v467 = vunpack.c.l.b16 %v431
        %v468 = vunpack.c.l.b16 %v432
        %v469 = vunpack.c.l.b16 %v433
        %v470 = vunpack.c.l.b16 %v434
        %v471 = vunpack.c.l.b16 %v435
        %v472 = vunpack.c.l.b16 %v436
        %v473 = vunpack.c.l.b16 %v437
        %v474 = vunpack.c.l.b16 %v438
        %v475 = vunpack.c.l.b16 %v439
        %v476 = vunpack.c.l.b16 %v440
        %v477 = vunpack.c.l.b16 %v441
        %v478 = vunpack.c.l.b16 %v442
        %v479 = vunpack.c.l.b16 %v443
        %v480 = vunpack.c.l.b16 %v444
        %v481 = vpack.c.b16 %v466, %v465
        %v482 = vpack.c.b16 %v468, %v467
        %v483 = vpack.c.b16 %v470, %v469
        %v484 = vpack.c.b16 %v472, %v471
        %v485 = vpack.c.b16 %v474, %v473
        %v486 = vpack.c.b16 %v476, %v475
        %v487 = vpack.c.b16 %v478, %v477
        %v488 = vpack.c.b16 %v480, %v479
        %497 = vmatpush.bf16.msra.mxu0 %v488
        %498 = vmatpush.bf16.msra.mxu0 %v487
        %499 = vmatpush.bf16.msra.mxu0 %v486
        %500 = vmatpush.bf16.msra.mxu0 %v485
        %501 = vmatpush.bf16.msra.mxu0 %v484
        %502 = vmatpush.bf16.msra.mxu0 %v483
        %503 = vmatpush.bf16.msra.mxu0 %v482
        %504 = vmatpush.bf16.msra.mxu0 %v481
        %505 = vmatmul.bf16.gmra.mxu0 %v365
        %v506 = vpop.f32.mrf.mxu0
        %v507 = vadd.f32 %v447, %v506
        %v508 = vpop.f32.mrf.mxu0
        %v509 = vadd.f32 %v447, %v508
        %510 = vdwg.mxu0
        %v511 = vpack.c.bf16 %v425, %v425
        %v512 = vpack.c.bf16 %v427, %v427
        %513 = vst [vmem:[%s328] sm:$0xf] %v511
        %514 = vst [vmem:[%s328 + $0x4] sm:$0xf] %v512
        %v515 = vpack.c.bf16 %v507, %v507
        %v516 = vpack.c.bf16 %v509, %v509
        %517 = vst [vmem:[%s335] sm:$0xf] %v515
        %518 = vst [vmem:[%s335 + $0x4] sm:$0xf] %v516
        %s519 = sand.u32 %s162, 1
        %s520 = scalar_lea.sflag [#allocation4], %s519
        %s521 = sand.u32 %s162, 1
        %s522 = smul.addr %s521, 8
        %s523 = scalar_lea.vmem [#allocation8], %s522
        %s524 = sand.u32 %s190, 1
        %s525 = scalar_lea.sflag [#allocation10], %s524
        %s526 = sand.u32 %s190, 1
        %s527 = smul.addr %s526, 8
        %s528 = scalar_lea.vmem [#allocation9], %s527
        // Predicated region
        $region53: #{tpu_custom_call.1} parent=39 // pred_check
          %p529 = pneg %p172
        $region54: #{tpu_custom_call.1} parent=39 // pred_check_branch
          %531 = sbr.rel (%p529) target = $region56
        $region55: #{tpu_custom_call.1} parent=39 // pred_region
          %s532 = smul.u32 2, %s33
          %534 = vsyncadd %s520, 0
          %s535 = smul.addr %s32, 2
          %s536 = sadd.s32 %s532, %s535
          %s537 = smul.addr %s536, 4
          %s538 = scalar_lea.hbm %s5, %s537
          %s539 = sshll.u32 %s523, 4
          %s540 = int_to_ptr.vmem [resolvable:$true] %s539
          %s541 = sshll.u32 %s538, 4
          %s542 = int_to_ptr.hbm [resolvable:$true] %s541
          %547 = dma.vmem_to_hbm [thread:$0]  %s540, 128, %s542, %s520, 64, 64, 4
        $region56: #{tpu_custom_call.1} parent=39 // pred_fallthru
          _
        // Predicated region
        $region57: #{tpu_custom_call.1} parent=39 // pred_check
          %p548 = pneg %p200
        $region58: #{tpu_custom_call.1} parent=39 // pred_check_branch
          %550 = sbr.rel (%p548) target = $region60
        $region59: #{tpu_custom_call.1} parent=39 // pred_region
          %s551 = smul.u32 2, %s33
          %553 = vsyncadd %s525, 0
          %s554 = smul.addr %s32, 2
          %s555 = sadd.s32 %s551, %s554
          %s556 = smul.addr %s555, 4
          %s557 = scalar_lea.hbm %s6, %s556
          %s558 = sshll.u32 %s528, 4
          %s559 = int_to_ptr.vmem [resolvable:$true] %s558
          %s560 = sshll.u32 %s557, 4
          %s561 = int_to_ptr.hbm [resolvable:$true] %s560
          %566 = dma.vmem_to_hbm [thread:$0]  %s559, 128, %s561, %s525, 64, 64, 4
        $region60: #{tpu_custom_call.1} parent=39 // pred_fallthru
          _
      $region40: #{tpu_custom_call.1} parent=5 // pred_fallthru
        _
      %p567 = scmp.le.s32.totalorder 2, %s23
      // Predicated region
      $region61: #{tpu_custom_call.1} parent=5 // pred_check
        %p568 = pneg %p567
      $region62: #{tpu_custom_call.1} parent=5 // pred_check_branch
        %570 = sbr.rel (%p568) target = $region64
      $region63: #{tpu_custom_call.1} parent=5 // pred_region
        %s571 = ssub.s32 %s23, 2
        // Predicated region
        $region65: #{tpu_custom_call.1} parent=63 // pred_check
          %p572 = pneg %p178
        $region66: #{tpu_custom_call.1} parent=63 // pred_check_branch
          %574 = sbr.rel (%p572) target = $region68
        $region67: #{tpu_custom_call.1} parent=63 // pred_region
          %s575 = sand.u32 %s163, 1
          %s576 = scalar_lea.sflag [#allocation4], %s575
          %s577 = sand.u32 %s163, 1
          %s578 = smul.addr %s577, 8
          %s579 = scalar_lea.vmem [#allocation8], %s578
          %581 = dma.done %s576, 128
        $region68: #{tpu_custom_call.1} parent=63 // pred_fallthru
          _
        // Predicated region
        $region69: #{tpu_custom_call.1} parent=63 // pred_check
          %p582 = pneg %p206
        $region70: #{tpu_custom_call.1} parent=63 // pred_check_branch
          %584 = sbr.rel (%p582) target = $region72
        $region71: #{tpu_custom_call.1} parent=63 // pred_region
          %s585 = sand.u32 %s191, 1
          %s586 = scalar_lea.sflag [#allocation10], %s585
          %s587 = sand.u32 %s191, 1
          %s588 = smul.addr %s587, 8
          %s589 = scalar_lea.vmem [#allocation9], %s588
          %591 = dma.done %s586, 128
        $region72: #{tpu_custom_call.1} parent=63 // pred_fallthru
          _
      $region64: #{tpu_custom_call.1} parent=5 // pred_fallthru
        _
    $region6: #{tpu_custom_call.1} parent=1 // loop_footer
      %s27 = sadd.s32 1, %s23
    $region7: #{tpu_custom_call.1} parent=1 // loop_footer_branch
      %22 = sbr.rel target = $region3
    $region8: #{tpu_custom_call.1} parent=1 // loop_exit
      _
    %592 = vsyncpa [#allocation3], 1
    %s593 = scalar_lea.sflag [#allocation3], 1
    %594 = vsyncpa %s593, 1
    %595 = vsyncpa [#allocation6], 1
    %596 = vsyncpa [#allocation4], 1
    %s597 = scalar_lea.sflag [#allocation4], 1
    %598 = vsyncpa %s597, 1
    %599 = vsyncpa [#allocation10], 1
    %s600 = scalar_lea.sflag [#allocation10], 1
    %601 = vsyncpa %s600, 1

</llo_original>
